<compile_context>
chip_gen: v7x
topology: tpu7x:2x2x1
jax: 0.10.0
libtpu: 0.0.40
codegen_flags: <defaults>
</compile_context>

<pallas_src>
import jax
import jax.numpy as jnp
from jax.experimental import pallas as pl
from jax.experimental.pallas import tpu as pltpu


# ----------------------------------------------------------------------------
# Kernel body
# ----------------------------------------------------------------------------
def _attention_kernel(x_ref, w1_ref, b1_ref, w2_ref, o_ref):
    """One grid step = a chunk of Bt batches, each with its full (N, F) slab."""
    Bt, N, F = x_ref.shape
    A = w1_ref.shape[1]

    x = x_ref[...]                                            # (Bt, N, F)

    # ---- Linear(F, A) + ReLU -------------------------------------------------
    if N % 8 == 0:
        # Sublane-aligned N: reshape is a free view; fold batches into the MXU
        # M dimension for one large matmul.
        h = jnp.dot(x.reshape(Bt * N, F), w1_ref[...],
                    preferred_element_type=jnp.float32).reshape(Bt, N, A)
    else:
        # Unaligned N: contract F directly on the 3-D tile so the reshape does
        # not materialize a VMEM copy of the slab.
        h = jax.lax.dot_general(x, w1_ref[...],
                                dimension_numbers=(((2,), (0,)), ((), ())),
                                preferred_element_type=jnp.float32)
    h = jnp.maximum(h + b1_ref[...], 0.0)                     # (Bt, N, A), f32

    # ---- Linear(A, 1): VPU multiply + lane reduce (no 1-wide MXU pass) -------
    s = jnp.sum(h * w2_ref[...], axis=-1)                     # (Bt, N), f32
    # b2 is a constant shift of the logits: softmax(s + b2) == softmax(s),
    # so it is dropped from the kernel entirely (exact, not an approximation).

    # ---- Softmax over the sequence axis N (PyTorch Softmax(dim=1)) -----------
    m = jnp.max(s, axis=-1, keepdims=True)                    # (Bt, 1)
    e = jnp.exp(s - m)                                        # (Bt, N)
    denom = jnp.sum(e, axis=-1, keepdims=True)                # (Bt, 1)
    attn = e * pl.reciprocal(denom, approx=False)             # (Bt, N)

    # ---- attended_features = features * attention_weights --------------------
    # Cast attn down to the feature dtype instead of upcasting the big x slab.
    o_ref[...] = (x * attn[:, :, None].astype(x.dtype)).astype(o_ref.dtype)


# ----------------------------------------------------------------------------
# Generation-aware tiling / VMEM budgeting
# ----------------------------------------------------------------------------
def _tpu_generation():
    try:
        kind = jax.devices()[0].device_kind.lower()
    except Exception:
        return 6
    if "v7" in kind or "7x" in kind:
        return 7
    if "v6" in kind:
        return 6
    if "v5" in kind:
        return 5
    if "v4" in kind:
        return 4
    return 6


def _vmem_capacity_bytes(gen):
    try:
        cap = getattr(pltpu.get_tpu_info(), "vmem_capacity_bytes", None)
        if cap:
            return int(cap)
    except Exception:
        pass
    # v7x: 64 MiB per TensorCore; v4/v5e/v6e: 128 MiB.
    return (64 << 20) if gen >= 7 else (128 << 20)


def _footprint_bytes(d, N, F, A, in_itemsize, w_itemsize):
    """Per-step VMEM footprint for a batch chunk of d."""
    io = 4 * d * N * F * in_itemsize        # in + out slabs, double-buffered
    inter = d * N * A * 4                   # f32 post-matmul intermediate h
    scores = 4 * d * N * 4                  # s / e / attn score tiles (f32)
    weights = 2 * (F * A + 2 * A) * w_itemsize   # resident weights (dbl-buf)
    return io + inter + scores + weights


def _pick_batch_tile(B, N, F, A, in_itemsize, w_itemsize, vmem_budget,
                     min_grid_steps=4):
    """Largest batch chunk Bt that fits the VMEM budget (the kernel is
    HBM-bound, so bigger tiles amortize the ~0.35 us per-step overhead), while
    keeping >= min_grid_steps grid steps so the pipeline can overlap DMA with
    compute and a 2-TensorCore chip still has >= 2 steps per core."""
    divisors = [d for d in range(1, B + 1) if B % d == 0]
    fitting = [d for d in divisors
               if _footprint_bytes(d, N, F, A, in_itemsize, w_itemsize)
               <= vmem_budget] or [1]
    pipelined = [d for d in fitting if B // d >= min_grid_steps]
    return (pipelined or fitting)[-1]        # ascending order -> take largest


# ----------------------------------------------------------------------------
# pallas_call wrapper
# ----------------------------------------------------------------------------
def _build_call(B, N, F, A, Bt, out_dtype, semantics, vmem_limit_bytes):
    return pl.pallas_call(
        _attention_kernel,
        out_shape=jax.ShapeDtypeStruct((B, N, F), out_dtype),
        grid_spec=pltpu.PrefetchScalarGridSpec(
            num_scalar_prefetch=0,
            grid=(B // Bt,),
            in_specs=[
                pl.BlockSpec((Bt, N, F), lambda g: (g, 0, 0)),   # features
                pl.BlockSpec((F, A), lambda g: (0, 0)),          # W1 (resident)
                pl.BlockSpec((1, A), lambda g: (0, 0)),          # b1
                pl.BlockSpec((1, A), lambda g: (0, 0)),          # W2 as a row
            ],
            out_specs=pl.BlockSpec((Bt, N, F), lambda g: (g, 0, 0)),
        ),
        compiler_params=pltpu.CompilerParams(
            dimension_semantics=semantics,
            vmem_limit_bytes=vmem_limit_bytes,
        ),
    )


def attention_layer(features, w1, b1, w2, b2):
    """features: (B, N, F); w1: (F, A); b1: (1, A); w2: (A, 1); b2: (1, 1)."""
    B, N, F = features.shape
    A = w1.shape[1]

    b1 = jnp.asarray(b1, jnp.float32).reshape(1, A)
    w2_row = jnp.asarray(w2, jnp.float32).reshape(1, A)      # (A, 1) -> (1, A)
    del b2   # constant logit shift -> cancels exactly inside the softmax

    gen = _tpu_generation()
    cap = _vmem_capacity_bytes(gen)
    # ~96 MiB scoped limit on 128 MiB chips (v5e/v6e), ~48 MiB on 64 MiB v7x.
    vmem_limit = int(min(96 << 20, (cap * 3) // 4))
    budget = max(vmem_limit - (8 << 20), 8 << 20)  # headroom for internal scratch

    Bt = _pick_batch_tile(
        B, N, F, A,
        in_itemsize=jnp.dtype(features.dtype).itemsize,
        w_itemsize=4,                 # weights are carried in f32
        vmem_budget=budget,
        min_grid_steps=4)

    # v7x has 2 TensorCores per chip: shard the batch grid axis across them.
    semantics = (pltpu.CORE_PARALLEL,) if gen >= 7 else ("parallel",)
    call = _build_call(B, N, F, A, Bt, features.dtype, semantics, vmem_limit)
    try:
        return call(features, w1, b1, w2_row)
    except Exception:
        if gen < 7:
            raise
        # Fall back to plain parallel semantics if CORE_PARALLEL is rejected
        # by this runtime; correctness is unchanged.
        call = _build_call(B, N, F, A, Bt, features.dtype, ("parallel",),
                           vmem_limit)
        return call(features, w1, b1, w2_row)


# ----------------------------------------------------------------------------
# Pure-JAX reference (matches the PyTorch module)
# ----------------------------------------------------------------------------
def reference(features, w1, b1, w2, b2):
    hp = jax.lax.Precision.HIGHEST
    h = jnp.maximum(jnp.dot(features, w1, precision=hp) + b1, 0.0)
    s = jnp.dot(h, w2, precision=hp) + b2                     # (B, N, 1)
    attn = jax.nn.softmax(s, axis=1)
    return features * attn


if __name__ == "__main__":
    # Small shapes consistent with the module: attention_dim = 512 as in the
    # PyTorch spec; feature_dim = 128 keeps every load/store lane-dense.
    B, N, F, A = 8, 64, 128, 512

    key = jax.random.PRNGKey(0)
    k_x, k_w1, k_b1, k_w2, k_b2 = jax.random.split(key, 5)

    # NOTE(perf): bf16 features would roughly halve HBM traffic (the kernel is
    # bandwidth-bound) and the kernel supports it, but f32 is kept here to
    # match the PyTorch module's default precision and the tight tolerance.
    features = jax.random.normal(k_x, (B, N, F), dtype=jnp.float32)

    # Parameters stored pre-transposed so the kernel computes x @ W (+ b),
    # matching nn.Linear(F, A) and nn.Linear(A, 1).
    w1 = jax.random.normal(k_w1, (F, A), dtype=jnp.float32) * 0.05
    b1 = jax.random.normal(k_b1, (1, A), dtype=jnp.float32) * 0.05
    w2 = jax.random.normal(k_w2, (A, 1), dtype=jnp.float32) * 0.05
    b2 = jax.random.normal(k_b2, (1, 1), dtype=jnp.float32) * 0.05

    out = jax.block_until_ready(attention_layer(features, w1, b1, w2, b2))
    ref = jax.block_until_ready(reference(features, w1, b1, w2, b2))

    assert out.shape == (B, N, F)
    max_diff = float(jnp.max(jnp.abs(out - ref)))
    assert jnp.allclose(out, ref, atol=3e-5, rtol=3e-5), (
        f"mismatch vs reference: max|diff|={max_diff:.3e}")

    print("KERNEL_OK")
</pallas_src>

<mosaic_0001>
module attributes {stable_mosaic.version = 11 : i64} {
  func.func @_attention_kernel(%arg0: i32, %arg1: memref<2x64x128xf32, #tpu.memory_space<vmem>>, %arg2: memref<128x512xf32, #tpu.memory_space<vmem>>, %arg3: memref<1x512xf32, #tpu.memory_space<vmem>>, %arg4: memref<1x512xf32, #tpu.memory_space<vmem>>, %arg5: memref<2x64x128xf32, #tpu.memory_space<vmem>>) attributes {dimension_semantics = [#tpu.dimension_semantics<parallel>], iteration_bounds = array<i64: 4>, scalar_prefetch = 0 : i64, scratch_operands = 0 : i64, tpu.core_type = #tpu.core_type<tc>, window_params = [{transform_indices = @transform_0, window_bounds = array<i64: 2, 64, 128>}, {pipeline_mode = #tpu.pipeline_mode<synchronous>, transform_indices = @transform_1, window_bounds = array<i64: 128, 512>}, {pipeline_mode = #tpu.pipeline_mode<synchronous>, transform_indices = @transform_2, window_bounds = array<i64: 1, 512>}, {pipeline_mode = #tpu.pipeline_mode<synchronous>, transform_indices = @transform_3, window_bounds = array<i64: 1, 512>}, {transform_indices = @transform_4, window_bounds = array<i64: 2, 64, 128>}]} {
    %c0 = arith.constant 0 : index
    %c0_0 = arith.constant 0 : index
    %c0_1 = arith.constant 0 : index
    %0 = vector.load %arg1[%c0, %c0_0, %c0_1] : memref<2x64x128xf32, #tpu.memory_space<vmem>>, vector<2x64x128xf32>
    %1 = vector.shape_cast %0 : vector<2x64x128xf32> to vector<128x128xf32>
    %c0_2 = arith.constant 0 : index
    %c0_3 = arith.constant 0 : index
    %2 = vector.load %arg2[%c0_2, %c0_3] : memref<128x512xf32, #tpu.memory_space<vmem>>, vector<128x512xf32>
    %cst = arith.constant dense<0.000000e+00> : vector<128x512xf32>
    %3 = tpu.matmul %1, %2, %cst {dimension_numbers = #tpu.dot_dimension_numbers<[1], [0], [0], [1], [0, 0, 1, 1], [], []>} : vector<128x128xf32>, vector<128x512xf32>, vector<128x512xf32> -> vector<128x512xf32>
    %4 = vector.shape_cast %3 : vector<128x512xf32> to vector<2x64x512xf32>
    %c0_4 = arith.constant 0 : index
    %c0_5 = arith.constant 0 : index
    %5 = vector.load %arg3[%c0_4, %c0_5] : memref<1x512xf32, #tpu.memory_space<vmem>>, vector<1x512xf32>
    %6 = vector.shape_cast %5 : vector<1x512xf32> to vector<1x1x512xf32>
    %7 = vector.broadcast %6 : vector<1x1x512xf32> to vector<2x64x512xf32>
    %8 = arith.addf %4, %7 : vector<2x64x512xf32>
    %cst_6 = arith.constant 0.000000e+00 : f32
    %9 = vector.broadcast %cst_6 : f32 to vector<2x64x512xf32>
    %10 = arith.maximumf %8, %9 : vector<2x64x512xf32>
    %c0_7 = arith.constant 0 : index
    %c0_8 = arith.constant 0 : index
    %11 = vector.load %arg4[%c0_7, %c0_8] : memref<1x512xf32, #tpu.memory_space<vmem>>, vector<1x512xf32>
    %12 = vector.shape_cast %11 : vector<1x512xf32> to vector<1x1x512xf32>
    %13 = vector.broadcast %12 : vector<1x1x512xf32> to vector<2x64x512xf32>
    %14 = arith.mulf %10, %13 : vector<2x64x512xf32>
    %cst_9 = arith.constant dense<0.000000e+00> : vector<2x64xf32>
    %15 = vector.multi_reduction <add>, %14, %cst_9 [2] : vector<2x64x512xf32> to vector<2x64xf32>
    %cst_10 = arith.constant dense<0xFF800000> : vector<2xf32>
    %16 = vector.multi_reduction <maximumf>, %15, %cst_10 [1] : vector<2x64xf32> to vector<2xf32>
    %17 = vector.shape_cast %16 : vector<2xf32> to vector<2x1xf32>
    %18 = vector.broadcast %17 : vector<2x1xf32> to vector<2x64xf32>
    %19 = arith.subf %15, %18 : vector<2x64xf32>
    %20 = math.exp %19 : vector<2x64xf32>
    %cst_11 = arith.constant dense<0.000000e+00> : vector<2xf32>
    %21 = vector.multi_reduction <add>, %20, %cst_11 [1] : vector<2x64xf32> to vector<2xf32>
    %22 = vector.shape_cast %21 : vector<2xf32> to vector<2x1xf32>
    %23 = tpu.reciprocal %22 : vector<2x1xf32> -> vector<2x1xf32>
    %24 = vector.broadcast %23 : vector<2x1xf32> to vector<2x64xf32>
    %25 = arith.mulf %20, %24 : vector<2x64xf32>
    %26 = vector.shape_cast %25 : vector<2x64xf32> to vector<2x64x1xf32>
    %27 = vector.broadcast %26 : vector<2x64x1xf32> to vector<2x64x128xf32>
    %28 = arith.mulf %0, %27 : vector<2x64x128xf32>
    %c0_12 = arith.constant 0 : index
    %c0_13 = arith.constant 0 : index
    %c0_14 = arith.constant 0 : index
    %29 = vector.load %arg5[%c0_12, %c0_13, %c0_14] : memref<2x64x128xf32, #tpu.memory_space<vmem>>, vector<2x64x128xf32>
    tpu.vector_store %arg5[%c0_12, %c0_13, %c0_14], %28 {strides = array<i32>} : memref<2x64x128xf32, #tpu.memory_space<vmem>>, vector<2x64x128xf32>,
    return
  }
  func.func @transform_0(%arg0: i32) -> (i32, i32, i32) {
    %c0_i32 = arith.constant 0 : i32
    %c0_i32_0 = arith.constant 0 : i32
    %c0_i32_1 = arith.constant 0 : i32
    return %arg0, %c0_i32, %c0_i32_0 : i32, i32, i32
  }
  func.func @transform_1(%arg0: i32) -> (i32, i32) {
    %c0_i32 = arith.constant 0 : i32
    %c0_i32_0 = arith.constant 0 : i32
    %c0_i32_1 = arith.constant 0 : i32
    return %c0_i32, %c0_i32_0 : i32, i32
  }
  func.func @transform_2(%arg0: i32) -> (i32, i32) {
    %c0_i32 = arith.constant 0 : i32
    %c0_i32_0 = arith.constant 0 : i32
    %c0_i32_1 = arith.constant 0 : i32
    return %c0_i32, %c0_i32_0 : i32, i32
  }
  func.func @transform_3(%arg0: i32) -> (i32, i32) {
    %c0_i32 = arith.constant 0 : i32
    %c0_i32_0 = arith.constant 0 : i32
    %c0_i32_1 = arith.constant 0 : i32
    return %c0_i32, %c0_i32_0 : i32, i32
  }
  func.func @transform_4(%arg0: i32) -> (i32, i32, i32) {
    %c0_i32 = arith.constant 0 : i32
    %c0_i32_0 = arith.constant 0 : i32
    %c0_i32_1 = arith.constant 0 : i32
    return %arg0, %c0_i32, %c0_i32_0 : i32, i32, i32
  }
}

</mosaic_0001>

<llo_original>
// kernel: tpu_custom_call.1
$region0: #{tpu_custom_call.1}
  #allocation0 [shape = 'u32[]', space=smem, size = 0x4, offset = 0x4, fixed_abs, tag = 'smem constant byte address 0x4 - core index']
  #allocation1 [shape = 'u32[144,128]{1,0:T(1,128)}', space=vmem, size = 0x12000, scoped, tag = 'internal scratch']
  %s0 = inlined_call_operand.hbm [shape: f32[8,64,128], index: 0, kind: input, shape index: {}]
  %s1 = inlined_call_operand.hbm [shape: f32[128,512], index: 1, kind: input, shape index: {}]
  %s2 = inlined_call_operand.hbm [shape: f32[1,512], index: 2, kind: input, shape index: {}]
  %s3 = inlined_call_operand.hbm [shape: f32[1,512], index: 3, kind: input, shape index: {}]
  %s4 = inlined_call_operand.hbm [shape: f32[8,64,128], index: 4, kind: output, shape index: {}]
  %s5 = sld [smem:[#allocation0]]
  $region65: #{tpu_custom_call.1} parent=0
    _
  %s7 = ssub.s32 1, %s5
  %s8 = scalar_select 0, %s7, %s5
  $region1: #{tpu_custom_call.1} parent=0
    #allocation2 [shape = 'u8[131072]{0}', space=vmem, size = 0x20000, scoped, tag = 'input window, operand 0']
    #allocation3 [shape = 's32[2]{0}', space=sflag, size = 0x8, scoped, tag = 'scoped memory for tpu_custom_call.1']
    #allocation4 [shape = 's32[2]{0}', space=sflag, size = 0x8, scoped, tag = 'scoped memory for tpu_custom_call.1']
    #allocation5 [shape = 'u8[262144]{0}', space=vmem, size = 0x40000, scoped, tag = 'input window, operand 1, single buffered']
    #allocation6 [shape = 's32[1]{0}', space=sflag, size = 0x4, scoped, tag = 'scoped memory for tpu_custom_call.1']
    #allocation7 [shape = 'u8[2048]{0}', space=vmem, size = 0x800, scoped, tag = 'input window, operand 2, single buffered']
    #allocation8 [shape = 'u8[2048]{0}', space=vmem, size = 0x800, scoped, tag = 'input window, operand 3, single buffered']
    #allocation9 [shape = 's32[1]{0}', space=sflag, size = 0x4, scoped, tag = 'scoped memory for tpu_custom_call.1']
    #allocation10 [shape = 'u8[131072]{0}', space=vmem, size = 0x20000, scoped, tag = 'output window, operand 0']
    %9 = vsyncpa [#allocation3], 0
    %s10 = scalar_lea.sflag [#allocation3], 1
    %11 = vsyncpa %s10, 0
    %12 = vsyncpa [#allocation6], 0
    %13 = vsyncpa [#allocation9], 0
    %14 = vsyncpa [#allocation4], 0
    %s15 = scalar_lea.sflag [#allocation4], 1
    %16 = vsyncpa %s15, 0
    loop: start=0, step=1, limit=6
    $region2: #{tpu_custom_call.1} parent=1 // loop_pre_header
      _
    $region3: #{tpu_custom_call.1} parent=1 // loop_header
      %s18 = sphi 0, %s22
      %p19 = scmp.ge.s32.totalorder %s18, 6
      %s28 = sphi 0, %s30
      %s31 = sphi 0, %s28
      %s32 = sphi 0, %s31
      %s48 = sphi 0, %s32
      %s52 = sphi 0, %s52
      %s54 = sphi 0, %s52
      %s55 = sphi 0, %s54
      %s69 = sphi 0, %s55
      %s73 = sphi 0, %s73
      %s75 = sphi 0, %s73
      %s76 = sphi 0, %s75
      %s90 = sphi 0, %s76
      %s94 = sphi 0, %s94
      %s96 = sphi 0, %s94
      %s97 = sphi 0, %s96
      %s111 = sphi 0, %s97
      %s117 = sphi 0, %s119
      %s120 = sphi 0, %s117
      %s121 = sphi 0, %s120
      %s137 = sphi 0, %s121
    $region4: #{tpu_custom_call.1} parent=1 // loop_header_branch
      %21 = sbr.rel (%p19) target = $region8
    $region5: #{tpu_custom_call.1} parent=1 // loop_body
      %s23 = ssub.s32 %s18, 1
      %s24 = ssub.s32 %s18, 2
      %s25 = sadd.s32 %s18, 1
      %s26 = ssub.s32 %s18, %s25
      %p27 = scmp.eq.s32.totalorder %s26, 0
      %s29 = sadd.s32 %s28, 1
      %s30 = scalar_select %p27, %s28, %s29
      %p33 = pneg %p27
      %p34 = scmp.eq.s32.totalorder %s18, 3
      %p35 = por %p33, %p34
      %p36 = scmp.ne.s32.totalorder %s28, %s31
      %p37 = scmp.eq.s32.totalorder %s18, 0
      %p38 = por %p36, %p37
      %p39 = scmp.ne.s32.totalorder %s28, %s31
      %p40 = scmp.eq.s32.totalorder %s23, 3
      %p41 = por %p39, %p40
      %p42 = scmp.ne.s32.totalorder %s31, %s32
      %p43 = scmp.eq.s32.totalorder %s23, 0
      %p44 = por %p42, %p43
      %p45 = scmp.ne.s32.totalorder %s31, %s32
      %p46 = scmp.eq.s32.totalorder %s24, 3
      %p47 = por %p45, %p46
      %p49 = scmp.ne.s32.totalorder %s32, %s48
      %p50 = scmp.eq.s32.totalorder %s24, 0
      %p51 = por %p49, %p50
      %s53 = sadd.s32 %s52, 1
      %p56 = scmp.eq.s32.totalorder %s18, 3
      %p57 = scmp.ne.s32.totalorder %s52, %s54
      %p58 = scmp.eq.s32.totalorder %s18, 0
      %p59 = por %p57, %p58
      %p60 = scmp.ne.s32.totalorder %s52, %s54
      %p61 = scmp.eq.s32.totalorder %s23, 3
      %p62 = por %p60, %p61
      %p63 = scmp.ne.s32.totalorder %s54, %s55
      %p64 = scmp.eq.s32.totalorder %s23, 0
      %p65 = por %p63, %p64
      %p66 = scmp.ne.s32.totalorder %s54, %s55
      %p67 = scmp.eq.s32.totalorder %s24, 3
      %p68 = por %p66, %p67
      %p70 = scmp.ne.s32.totalorder %s55, %s69
      %p71 = scmp.eq.s32.totalorder %s24, 0
      %p72 = por %p70, %p71
      %s74 = sadd.s32 %s73, 1
      %p77 = scmp.eq.s32.totalorder %s18, 3
      %p78 = scmp.ne.s32.totalorder %s73, %s75
      %p79 = scmp.eq.s32.totalorder %s18, 0
      %p80 = por %p78, %p79
      %p81 = scmp.ne.s32.totalorder %s73, %s75
      %p82 = scmp.eq.s32.totalorder %s23, 3
      %p83 = por %p81, %p82
      %p84 = scmp.ne.s32.totalorder %s75, %s76
      %p85 = scmp.eq.s32.totalorder %s23, 0
      %p86 = por %p84, %p85
      %p87 = scmp.ne.s32.totalorder %s75, %s76
      %p88 = scmp.eq.s32.totalorder %s24, 3
      %p89 = por %p87, %p88
      %p91 = scmp.ne.s32.totalorder %s76, %s90
      %p92 = scmp.eq.s32.totalorder %s24, 0
      %p93 = por %p91, %p92
      %s95 = sadd.s32 %s94, 1
      %p98 = scmp.eq.s32.totalorder %s18, 3
      %p99 = scmp.ne.s32.totalorder %s94, %s96
      %p100 = scmp.eq.s32.totalorder %s18, 0
      %p101 = por %p99, %p100
      %p102 = scmp.ne.s32.totalorder %s94, %s96
      %p103 = scmp.eq.s32.totalorder %s23, 3
      %p104 = por %p102, %p103
      %p105 = scmp.ne.s32.totalorder %s96, %s97
      %p106 = scmp.eq.s32.totalorder %s23, 0
      %p107 = por %p105, %p106
      %p108 = scmp.ne.s32.totalorder %s96, %s97
      %p109 = scmp.eq.s32.totalorder %s24, 3
      %p110 = por %p108, %p109
      %p112 = scmp.ne.s32.totalorder %s97, %s111
      %p113 = scmp.eq.s32.totalorder %s24, 0
      %p114 = por %p112, %p113
      %s115 = ssub.s32 %s18, %s25
      %p116 = scmp.eq.s32.totalorder %s115, 0
      %s118 = sadd.s32 %s117, 1
      %s119 = scalar_select %p116, %s117, %s118
      %p122 = pneg %p116
      %p123 = scmp.eq.s32.totalorder %s18, 3
      %p124 = por %p122, %p123
      %p125 = scmp.ne.s32.totalorder %s117, %s120
      %p126 = scmp.eq.s32.totalorder %s18, 0
      %p127 = por %p125, %p126
      %p128 = scmp.ne.s32.totalorder %s117, %s120
      %p129 = scmp.eq.s32.totalorder %s23, 3
      %p130 = por %p128, %p129
      %p131 = scmp.ne.s32.totalorder %s120, %s121
      %p132 = scmp.eq.s32.totalorder %s23, 0
      %p133 = por %p131, %p132
      %p134 = scmp.ne.s32.totalorder %s120, %s121
      %p135 = scmp.eq.s32.totalorder %s24, 3
      %p136 = por %p134, %p135
      %p138 = scmp.ne.s32.totalorder %s121, %s137
      %p139 = scmp.eq.s32.totalorder %s24, 0
      %p140 = por %p138, %p139
      %p141 = scmp.le.s32.totalorder 1, %s18
      %p142 = scmp.lt.s32.totalorder %s18, 5
      %p143 = pnand %p141, %p142
      %p144 = pneg %p143
      // Predicated region
      $region9: #{tpu_custom_call.1} parent=5 // pred_check
        _
      $region10: #{tpu_custom_call.1} parent=5 // pred_check_branch
        %146 = sbr.rel (%p143) target = $region12
      $region11: #{tpu_custom_call.1} parent=5 // pred_region
        %s147 = ssub.s32 %s18, 1
        // Predicated region
        $region13: #{tpu_custom_call.1} parent=11 // pred_check
          %p148 = pneg %p65
        $region14: #{tpu_custom_call.1} parent=11 // pred_check_branch
          %150 = sbr.rel (%p148) target = $region16
        $region15: #{tpu_custom_call.1} parent=11 // pred_region
          %s152 = ssub.s32 8192, 8192
          %153 = vsyncadd [#allocation6], %s152
          %s154 = sshll.u32 [#allocation5], 4
          %s155 = int_to_ptr.vmem [resolvable:$true] %s154
          %160 = dma.hbm_to_vmem [thread:$0]  %s1, 8192, %s155, [#allocation6], 512, 512, 32
        $region16: #{tpu_custom_call.1} parent=11 // pred_fallthru
          _
        // Predicated region
        $region17: #{tpu_custom_call.1} parent=11 // pred_check
          %p161 = pneg %p86
        $region18: #{tpu_custom_call.1} parent=11 // pred_check_branch
          %163 = sbr.rel (%p161) target = $region20
        $region19: #{tpu_custom_call.1} parent=11 // pred_region
          %s165 = ssub.s32 64, 64
          %166 = vsyncadd [#allocation6], %s165
          %s168 = sshll.u32 [#allocation7], 4
          %s169 = int_to_ptr.vmem [resolvable:$true] %s168
          %171 = dma.hbm_to_vmem [thread:$0]  %s2, 64, %s169, [#allocation6]
        $region20: #{tpu_custom_call.1} parent=11 // pred_fallthru
          _
        // Predicated region
        $region21: #{tpu_custom_call.1} parent=11 // pred_check
          %p172 = pneg %p107
        $region22: #{tpu_custom_call.1} parent=11 // pred_check_branch
          %174 = sbr.rel (%p172) target = $region24
        $region23: #{tpu_custom_call.1} parent=11 // pred_region
          %s176 = ssub.s32 64, 64
          %177 = vsyncadd [#allocation9], %s176
          %s179 = sshll.u32 [#allocation8], 4
          %s180 = int_to_ptr.vmem [resolvable:$true] %s179
          %182 = dma.hbm_to_vmem [thread:$0]  %s3, 64, %s180, [#allocation9]
        $region24: #{tpu_custom_call.1} parent=11 // pred_fallthru
          _
      $region12: #{tpu_custom_call.1} parent=5 // pred_fallthru
        _
      %p183 = scmp.lt.s32.totalorder %s18, 4
      // Predicated region
      $region25: #{tpu_custom_call.1} parent=5 // pred_check
        %p184 = pneg %p183
      $region26: #{tpu_custom_call.1} parent=5 // pred_check_branch
        %186 = sbr.rel (%p184) target = $region28
      $region27: #{tpu_custom_call.1} parent=5 // pred_region
        // Predicated region
        $region29: #{tpu_custom_call.1} parent=27 // pred_check
          %p187 = pneg %p38
        $region30: #{tpu_custom_call.1} parent=27 // pred_check_branch
          %189 = sbr.rel (%p187) target = $region32
        $region31: #{tpu_custom_call.1} parent=27 // pred_region
          %s190 = sand.u32 %s28, 1
          %s191 = scalar_lea.sflag [#allocation3], %s190
          %s192 = sand.u32 %s28, 1
          %s193 = smul.addr %s192, 128
          %s194 = scalar_lea.vmem [#allocation2], %s193
          %s195 = smul.u32 2, %s18
          %s197 = ssub.s32 2048, 2048
          %198 = vsyncadd %s191, %s197
          %s199 = smul.addr %s195, 8
          %s200 = smul.addr %s199, 128
          %s201 = scalar_lea.hbm %s0, %s200
          %s202 = sshll.u32 %s194, 4
          %s203 = int_to_ptr.vmem [resolvable:$true] %s202
          %208 = dma.hbm_to_vmem [thread:$0]  %s201, 2048, %s203, %s191, 128, 128, 8
        $region32: #{tpu_custom_call.1} parent=27 // pred_fallthru
          _
      $region28: #{tpu_custom_call.1} parent=5 // pred_fallthru
        _
      %p209 = scmp.le.s32.totalorder 1, %s18
      %p210 = scmp.lt.s32.totalorder %s18, 5
      %p211 = pnand %p209, %p210
      %p212 = pneg %p211
      // Predicated region
      $region33: #{tpu_custom_call.1} parent=5 // pred_check
        _
      $region34: #{tpu_custom_call.1} parent=5 // pred_check_branch
        %214 = sbr.rel (%p211) target = $region36
      $region35: #{tpu_custom_call.1} parent=5 // pred_region
        %s215 = ssub.s32 %s18, 1
        %s216 = sand.u32 %s31, 1
        %s217 = scalar_lea.sflag [#allocation3], %s216
        %s218 = sand.u32 %s31, 1
        %s219 = smul.addr %s218, 128
        %s220 = scalar_lea.vmem [#allocation2], %s219
        // Predicated region
        $region37: #{tpu_custom_call.1} parent=35 // pred_check
          %p221 = pneg %p44
        $region38: #{tpu_custom_call.1} parent=35 // pred_check_branch
          %223 = sbr.rel (%p221) target = $region40
        $region39: #{tpu_custom_call.1} parent=35 // pred_region
          %224 = dma.done %s217, 2048
        $region40: #{tpu_custom_call.1} parent=35 // pred_fallthru
          _
        // Predicated region
        $region41: #{tpu_custom_call.1} parent=35 // pred_check
          %p225 = pneg %p65
        $region42: #{tpu_custom_call.1} parent=35 // pred_check_branch
          %227 = sbr.rel (%p225) target = $region44
        $region43: #{tpu_custom_call.1} parent=35 // pred_region
          %228 = dma.done [#allocation6], 8192
        $region44: #{tpu_custom_call.1} parent=35 // pred_fallthru
          _
        // Predicated region
        $region45: #{tpu_custom_call.1} parent=35 // pred_check
          %p229 = pneg %p86
        $region46: #{tpu_custom_call.1} parent=35 // pred_check_branch
          %231 = sbr.rel (%p229) target = $region48
        $region47: #{tpu_custom_call.1} parent=35 // pred_region
          %232 = dma.done [#allocation6], 64
        $region48: #{tpu_custom_call.1} parent=35 // pred_fallthru
          _
        // Predicated region
        $region49: #{tpu_custom_call.1} parent=35 // pred_check
          %p233 = pneg %p107
        $region50: #{tpu_custom_call.1} parent=35 // pred_check_branch
          %235 = sbr.rel (%p233) target = $region52
        $region51: #{tpu_custom_call.1} parent=35 // pred_region
          %236 = dma.done [#allocation9], 64
        $region52: #{tpu_custom_call.1} parent=35 // pred_fallthru
          _
        %s237 = sand.u32 %s31, 1
        %s238 = scalar_lea.sflag [#allocation3], %s237
        %s239 = sand.u32 %s31, 1
        %s240 = smul.addr %s239, 128
        %s241 = scalar_lea.vmem [#allocation2], %s240
        %p242 = pneg %p44
        %p243 = pneg %p41
        %p244 = pneg %p65
        %p245 = pneg %p62
        %p246 = pneg %p86
        %p247 = pneg %p83
        %p248 = pneg %p107
        %p249 = pneg %p104
        %p250 = pneg %p133
        %p251 = pneg %p130
        %s252 = sand.u32 %s120, 1
        %s253 = scalar_lea.sflag [#allocation4], %s252
        %s254 = sand.u32 %s120, 1
        %s255 = smul.addr %s254, 128
        %s256 = scalar_lea.vmem [#allocation10], %s255
        %s257 = smul.u32 2, %s23
        %s258 = smul.u32 2, %s23
        %v259 = vld [vmem:[%s220] sm:$0xff]
        %v260 = vld [vmem:[%s220 + $0x8] sm:$0xff]
        %v261 = vld [vmem:[%s220 + $0x10] sm:$0xff]
        %v262 = vld [vmem:[%s220 + $0x18] sm:$0xff]
        %v263 = vld [vmem:[%s220 + $0x20] sm:$0xff]
        %v264 = vld [vmem:[%s220 + $0x28] sm:$0xff]
        %v265 = vld [vmem:[%s220 + $0x30] sm:$0xff]
        %v266 = vld [vmem:[%s220 + $0x38] sm:$0xff]
        %v267 = vld [vmem:[%s220 + $0x40] sm:$0xff]
        %v268 = vld [vmem:[%s220 + $0x48] sm:$0xff]
        %v269 = vld [vmem:[%s220 + $0x50] sm:$0xff]
        %v270 = vld [vmem:[%s220 + $0x58] sm:$0xff]
        %v271 = vld [vmem:[%s220 + $0x60] sm:$0xff]
        %v272 = vld [vmem:[%s220 + $0x68] sm:$0xff]
        %v273 = vld [vmem:[%s220 + $0x70] sm:$0xff]
        %v274 = vld [vmem:[%s220 + $0x78] sm:$0xff]
        %v275 = vld [vmem:[#allocation5] sm:$0xff]
        %v276 = vld [vmem:[#allocation5 + $0x8] sm:$0xff]
        %v277 = vld [vmem:[#allocation5 + $0x10] sm:$0xff]
        %v278 = vld [vmem:[#allocation5 + $0x18] sm:$0xff]
        %v279 = vld [vmem:[#allocation5 + $0x20] sm:$0xff]
        %v280 = vld [vmem:[#allocation5 + $0x28] sm:$0xff]
        %v281 = vld [vmem:[#allocation5 + $0x30] sm:$0xff]
        %v282 = vld [vmem:[#allocation5 + $0x38] sm:$0xff]
        %v283 = vld [vmem:[#allocation5 + $0x40] sm:$0xff]
        %v284 = vld [vmem:[#allocation5 + $0x48] sm:$0xff]
        %v285 = vld [vmem:[#allocation5 + $0x50] sm:$0xff]
        %v286 = vld [vmem:[#allocation5 + $0x58] sm:$0xff]
        %v287 = vld [vmem:[#allocation5 + $0x60] sm:$0xff]
        %v288 = vld [vmem:[#allocation5 + $0x68] sm:$0xff]
        %v289 = vld [vmem:[#allocation5 + $0x70] sm:$0xff]
        %v290 = vld [vmem:[#allocation5 + $0x78] sm:$0xff]
        %v291 = vld [vmem:[#allocation5 + $0x80] sm:$0xff]
        %v292 = vld [vmem:[#allocation5 + $0x88] sm:$0xff]
        %v293 = vld [vmem:[#allocation5 + $0x90] sm:$0xff]
        %v294 = vld [vmem:[#allocation5 + $0x98] sm:$0xff]
        %v295 = vld [vmem:[#allocation5 + $0xa0] sm:$0xff]
        %v296 = vld [vmem:[#allocation5 + $0xa8] sm:$0xff]
        %v297 = vld [vmem:[#allocation5 + $0xb0] sm:$0xff]
        %v298 = vld [vmem:[#allocation5 + $0xb8] sm:$0xff]
        %v299 = vld [vmem:[#allocation5 + $0xc0] sm:$0xff]
        %v300 = vld [vmem:[#allocation5 + $0xc8] sm:$0xff]
        %v301 = vld [vmem:[#allocation5 + $0xd0] sm:$0xff]
        %v302 = vld [vmem:[#allocation5 + $0xd8] sm:$0xff]
        %v303 = vld [vmem:[#allocation5 + $0xe0] sm:$0xff]
        %v304 = vld [vmem:[#allocation5 + $0xe8] sm:$0xff]
        %v305 = vld [vmem:[#allocation5 + $0xf0] sm:$0xff]
        %v306 = vld [vmem:[#allocation5 + $0xf8] sm:$0xff]
        %v307 = vld [vmem:[#allocation5 + $0x100] sm:$0xff]
        %v308 = vld [vmem:[#allocation5 + $0x108] sm:$0xff]
        %v309 = vld [vmem:[#allocation5 + $0x110] sm:$0xff]
        %v310 = vld [vmem:[#allocation5 + $0x118] sm:$0xff]
        %v311 = vld [vmem:[#allocation5 + $0x120] sm:$0xff]
        %v312 = vld [vmem:[#allocation5 + $0x128] sm:$0xff]
        %v313 = vld [vmem:[#allocation5 + $0x130] sm:$0xff]
        %v314 = vld [vmem:[#allocation5 + $0x138] sm:$0xff]
        %v315 = vld [vmem:[#allocation5 + $0x140] sm:$0xff]
        %v316 = vld [vmem:[#allocation5 + $0x148] sm:$0xff]
        %v317 = vld [vmem:[#allocation5 + $0x150] sm:$0xff]
        %v318 = vld [vmem:[#allocation5 + $0x158] sm:$0xff]
        %v319 = vld [vmem:[#allocation5 + $0x160] sm:$0xff]
        %v320 = vld [vmem:[#allocation5 + $0x168] sm:$0xff]
        %v321 = vld [vmem:[#allocation5 + $0x170] sm:$0xff]
        %v322 = vld [vmem:[#allocation5 + $0x178] sm:$0xff]
        %v323 = vld [vmem:[#allocation5 + $0x180] sm:$0xff]
        %v324 = vld [vmem:[#allocation5 + $0x188] sm:$0xff]
        %v325 = vld [vmem:[#allocation5 + $0x190] sm:$0xff]
        %v326 = vld [vmem:[#allocation5 + $0x198] sm:$0xff]
        %v327 = vld [vmem:[#allocation5 + $0x1a0] sm:$0xff]
        %v328 = vld [vmem:[#allocation5 + $0x1a8] sm:$0xff]
        %v329 = vld [vmem:[#allocation5 + $0x1b0] sm:$0xff]
        %v330 = vld [vmem:[#allocation5 + $0x1b8] sm:$0xff]
        %v331 = vld [vmem:[#allocation5 + $0x1c0] sm:$0xff]
        %v332 = vld [vmem:[#allocation5 + $0x1c8] sm:$0xff]
        %v333 = vld [vmem:[#allocation5 + $0x1d0] sm:$0xff]
        %v334 = vld [vmem:[#allocation5 + $0x1d8] sm:$0xff]
        %v335 = vld [vmem:[#allocation5 + $0x1e0] sm:$0xff]
        %v336 = vld [vmem:[#allocation5 + $0x1e8] sm:$0xff]
        %v337 = vld [vmem:[#allocation5 + $0x1f0] sm:$0xff]
        %v338 = vld [vmem:[#allocation5 + $0x1f8] sm:$0xff]
        %339 = vmatprep.subr.mxu0 %v276
        %340 = vmatpush1.msra.mxu0 %v275
        %341 = vmatprep.subr.mxu0 %v280
        %342 = vmatpush1.msra.mxu0 %v279
        %343 = vmatprep.subr.mxu0 %v284
        %344 = vmatpush1.msra.mxu0 %v283
        %345 = vmatprep.subr.mxu0 %v288
        %346 = vmatpush1.msra.mxu0 %v287
        %347 = vmatprep.subr.mxu0 %v292
        %348 = vmatpush1.msra.mxu0 %v291
        %349 = vmatprep.subr.mxu0 %v296
        %350 = vmatpush1.msra.mxu0 %v295
        %351 = vmatprep.subr.mxu0 %v300
        %352 = vmatpush1.msra.mxu0 %v299
        %353 = vmatprep.subr.mxu0 %v304
        %354 = vmatpush1.msra.mxu0 %v303
        %355 = vmatprep.subr.mxu0 %v308
        %356 = vmatpush1.msra.mxu0 %v307
        %357 = vmatprep.subr.mxu0 %v312
        %358 = vmatpush1.msra.mxu0 %v311
        %359 = vmatprep.subr.mxu0 %v316
        %360 = vmatpush1.msra.mxu0 %v315
        %361 = vmatprep.subr.mxu0 %v320
        %362 = vmatpush1.msra.mxu0 %v319
        %363 = vmatprep.subr.mxu0 %v324
        %364 = vmatpush1.msra.mxu0 %v323
        %365 = vmatprep.subr.mxu0 %v328
        %366 = vmatpush1.msra.mxu0 %v327
        %367 = vmatprep.subr.mxu0 %v332
        %368 = vmatpush1.msra.mxu0 %v331
        %369 = vmatprep.subr.mxu0 %v336
        %370 = vmatpush1.msra.mxu0 %v335
        %371 = vmatprep.subr.mxu0 0.0
        %372 = vmatpush1.msra.mxu0 0.0
        %373 = vmatprep.subr.mxu0 0.0
        %374 = vmatpush1.msra.mxu0 0.0
        %375 = vmatprep.subr.mxu0 0.0
        %376 = vmatpush1.msra.mxu0 0.0
        %377 = vmatprep.subr.mxu0 0.0
        %378 = vmatpush1.msra.mxu0 0.0
        %379 = vmatprep.subr.mxu0 0.0
        %380 = vmatpush1.msra.mxu0 0.0
        %381 = vmatprep.subr.mxu0 0.0
        %382 = vmatpush1.msra.mxu0 0.0
        %383 = vmatprep.subr.mxu0 0.0
        %384 = vmatpush1.msra.mxu0 0.0
        %385 = vmatprep.subr.mxu0 0.0
        %386 = vmatpush1.msra.mxu0 0.0
        %387 = vmatprep.subr.mxu0 0.0
        %388 = vmatpush1.msra.mxu0 0.0
        %389 = vmatprep.subr.mxu0 0.0
        %390 = vmatpush1.msra.mxu0 0.0
        %391 = vmatprep.subr.mxu0 0.0
        %392 = vmatpush1.msra.mxu0 0.0
        %393 = vmatprep.subr.mxu0 0.0
        %394 = vmatpush1.msra.mxu0 0.0
        %395 = vmatprep.subr.mxu0 0.0
        %396 = vmatpush1.msra.mxu0 0.0
        %397 = vmatprep.subr.mxu0 0.0
        %398 = vmatpush1.msra.mxu0 0.0
        %399 = vmatprep.subr.mxu0 0.0
        %400 = vmatpush1.msra.mxu0 0.0
        %401 = vmatprep.subr.mxu0 0.0
        %402 = vmatpush1.msra.mxu0 0.0
        %403 = vmatprep.mubr.f32.mxu0 0.0
        %404 = vmatmul.mubr.f32.gmra.mrb[0].mxu0 %v259
        %v405 = vpop.f32.mrb[0].mxu0
        %v406 = vadd.f32 0.0, %v405
        %v407 = vpop.f32.mrb[0].mxu0
        %v408 = vadd.f32 0.0, %v407
        %409 = vmatprep.mubr.f32.mxu0 0.0
        %410 = vmatmul.mubr.f32.gmra.mrb[0].mxu0 %v260
        %v411 = vpop.f32.mrb[0].mxu0
        %v412 = vadd.f32 0.0, %v411
        %v413 = vpop.f32.mrb[0].mxu0
        %v414 = vadd.f32 0.0, %v413
        %415 = vmatprep.mubr.f32.mxu0 0.0
        %416 = vmatmul.mubr.f32.gmra.mrb[0].mxu0 %v261
        %v417 = vpop.f32.mrb[0].mxu0
        %v418 = vadd.f32 0.0, %v417
        %v419 = vpop.f32.mrb[0].mxu0
        %v420 = vadd.f32 0.0, %v419
        %421 = vmatprep.mubr.f32.mxu0 0.0
        %422 = vmatmul.mubr.f32.gmra.mrb[0].mxu0 %v262
        %v423 = vpop.f32.mrb[0].mxu0
        %v424 = vadd.f32 0.0, %v423
        %v425 = vpop.f32.mrb[0].mxu0
        %v426 = vadd.f32 0.0, %v425
        %427 = vmatprep.mubr.f32.mxu0 0.0
        %428 = vmatmul.mubr.f32.gmra.mrb[0].mxu0 %v263
        %v429 = vpop.f32.mrb[0].mxu0
        %v430 = vadd.f32 0.0, %v429
        %v431 = vpop.f32.mrb[0].mxu0
        %v432 = vadd.f32 0.0, %v431
        %433 = vmatprep.mubr.f32.mxu0 0.0
        %434 = vmatmul.mubr.f32.gmra.mrb[0].mxu0 %v264
        %v435 = vpop.f32.mrb[0].mxu0
        %v436 = vadd.f32 0.0, %v435
        %v437 = vpop.f32.mrb[0].mxu0
        %v438 = vadd.f32 0.0, %v437
        %439 = vmatprep.mubr.f32.mxu0 0.0
        %440 = vmatmul.mubr.f32.gmra.mrb[0].mxu0 %v265
        %v441 = vpop.f32.mrb[0].mxu0
        %v442 = vadd.f32 0.0, %v441
        %v443 = vpop.f32.mrb[0].mxu0
        %v444 = vadd.f32 0.0, %v443
        %445 = vmatprep.mubr.f32.mxu0 0.0
        %446 = vmatmul.mubr.f32.gmra.mrb[0].mxu0 %v266
        %v447 = vpop.f32.mrb[0].mxu0
        %v448 = vadd.f32 0.0, %v447
        %v449 = vpop.f32.mrb[0].mxu0
        %v450 = vadd.f32 0.0, %v449
        %451 = vmatprep.mubr.f32.mxu0 0.0
        %452 = vmatmul.mubr.f32.gmra.mrb[0].mxu0 %v267
        %v453 = vpop.f32.mrb[0].mxu0
        %v454 = vadd.f32 0.0, %v453
        %v455 = vpop.f32.mrb[0].mxu0
        %v456 = vadd.f32 0.0, %v455
        %457 = vmatprep.mubr.f32.mxu0 0.0
        %458 = vmatmul.mubr.f32.gmra.mrb[0].mxu0 %v268
        %v459 = vpop.f32.mrb[0].mxu0
        %v460 = vadd.f32 0.0, %v459
        %v461 = vpop.f32.mrb[0].mxu0
        %v462 = vadd.f32 0.0, %v461
        %463 = vmatprep.mubr.f32.mxu0 0.0
        %464 = vmatmul.mubr.f32.gmra.mrb[0].mxu0 %v269
        %v465 = vpop.f32.mrb[0].mxu0
        %v466 = vadd.f32 0.0, %v465
        %v467 = vpop.f32.mrb[0].mxu0
        %v468 = vadd.f32 0.0, %v467
        %469 = vmatprep.mubr.f32.mxu0 0.0
        %470 = vmatmul.mubr.f32.gmra.mrb[0].mxu0 %v270
        %v471 = vpop.f32.mrb[0].mxu0
        %v472 = vadd.f32 0.0, %v471
        %v473 = vpop.f32.mrb[0].mxu0
        %v474 = vadd.f32 0.0, %v473
        %475 = vmatprep.mubr.f32.mxu0 0.0
        %476 = vmatmul.mubr.f32.gmra.mrb[0].mxu0 %v271
        %v477 = vpop.f32.mrb[0].mxu0
        %v478 = vadd.f32 0.0, %v477
        %v479 = vpop.f32.mrb[0].mxu0
        %v480 = vadd.f32 0.0, %v479
        %481 = vmatprep.mubr.f32.mxu0 0.0
        %482 = vmatmul.mubr.f32.gmra.mrb[0].mxu0 %v272
        %v483 = vpop.f32.mrb[0].mxu0
        %v484 = vadd.f32 0.0, %v483
        %v485 = vpop.f32.mrb[0].mxu0
        %v486 = vadd.f32 0.0, %v485
        %487 = vmatprep.mubr.f32.mxu0 0.0
        %488 = vmatmul.mubr.f32.gmra.mrb[0].mxu0 %v273
        %v489 = vpop.f32.mrb[0].mxu0
        %v490 = vadd.f32 0.0, %v489
        %v491 = vpop.f32.mrb[0].mxu0
        %v492 = vadd.f32 0.0, %v491
        %493 = vmatprep.mubr.f32.mxu0 0.0
        %494 = vmatmul.mubr.f32.gmra.mrb[0].mxu0 %v274
        %v495 = vpop.f32.mrb[0].mxu0
        %v496 = vadd.f32 0.0, %v495
        %v497 = vpop.f32.mrb[0].mxu0
        %v498 = vadd.f32 0.0, %v497
        %499 = vdwg.mxu0
        %500 = vmatprep.subr.mxu0 %v278
        %501 = vmatpush1.msra.mxu0 %v277
        %502 = vmatprep.subr.mxu0 %v282
        %503 = vmatpush1.msra.mxu0 %v281
        %504 = vmatprep.subr.mxu0 %v286
        %505 = vmatpush1.msra.mxu0 %v285
        %506 = vmatprep.subr.mxu0 %v290
        %507 = vmatpush1.msra.mxu0 %v289
        %508 = vmatprep.subr.mxu0 %v294
        %509 = vmatpush1.msra.mxu0 %v293
        %510 = vmatprep.subr.mxu0 %v298
        %511 = vmatpush1.msra.mxu0 %v297
        %512 = vmatprep.subr.mxu0 %v302
        %513 = vmatpush1.msra.mxu0 %v301
        %514 = vmatprep.subr.mxu0 %v306
        %515 = vmatpush1.msra.mxu0 %v305
        %516 = vmatprep.subr.mxu0 %v310
        %517 = vmatpush1.msra.mxu0 %v309
        %518 = vmatprep.subr.mxu0 %v314
        %519 = vmatpush1.msra.mxu0 %v313
        %520 = vmatprep.subr.mxu0 %v318
        %521 = vmatpush1.msra.mxu0 %v317
        %522 = vmatprep.subr.mxu0 %v322
        %523 = vmatpush1.msra.mxu0 %v321
        %524 = vmatprep.subr.mxu0 %v326
        %525 = vmatpush1.msra.mxu0 %v325
        %526 = vmatprep.subr.mxu0 %v330
        %527 = vmatpush1.msra.mxu0 %v329
        %528 = vmatprep.subr.mxu0 %v334
        %529 = vmatpush1.msra.mxu0 %v333
        %530 = vmatprep.subr.mxu0 %v338
        %531 = vmatpush1.msra.mxu0 %v337
        %532 = vmatprep.subr.mxu0 0.0
        %533 = vmatpush1.msra.mxu0 0.0
        %534 = vmatprep.subr.mxu0 0.0
        %535 = vmatpush1.msra.mxu0 0.0
        %536 = vmatprep.subr.mxu0 0.0
        %537 = vmatpush1.msra.mxu0 0.0
        %538 = vmatprep.subr.mxu0 0.0
        %539 = vmatpush1.msra.mxu0 0.0
        %540 = vmatprep.subr.mxu0 0.0
        %541 = vmatpush1.msra.mxu0 0.0
        %542 = vmatprep.subr.mxu0 0.0
        %543 = vmatpush1.msra.mxu0 0.0
        %544 = vmatprep.subr.mxu0 0.0
        %545 = vmatpush1.msra.mxu0 0.0
        %546 = vmatprep.subr.mxu0 0.0
        %547 = vmatpush1.msra.mxu0 0.0
        %548 = vmatprep.subr.mxu0 0.0
        %549 = vmatpush1.msra.mxu0 0.0
        %550 = vmatprep.subr.mxu0 0.0
        %551 = vmatpush1.msra.mxu0 0.0
        %552 = vmatprep.subr.mxu0 0.0
        %553 = vmatpush1.msra.mxu0 0.0
        %554 = vmatprep.subr.mxu0 0.0
        %555 = vmatpush1.msra.mxu0 0.0
        %556 = vmatprep.subr.mxu0 0.0
        %557 = vmatpush1.msra.mxu0 0.0
        %558 = vmatprep.subr.mxu0 0.0
        %559 = vmatpush1.msra.mxu0 0.0
        %560 = vmatprep.subr.mxu0 0.0
        %561 = vmatpush1.msra.mxu0 0.0
        %562 = vmatprep.subr.mxu0 0.0
        %563 = vmatpush1.msra.mxu0 0.0
        %564 = vmatprep.mubr.f32.mxu0 0.0
        %565 = vmatmul.mubr.f32.gmra.mrb[0].mxu0 %v259
        %v566 = vpop.f32.mrb[0].mxu0
        %v567 = vadd.f32 0.0, %v566
        %v568 = vpop.f32.mrb[0].mxu0
        %v569 = vadd.f32 0.0, %v568
        %570 = vmatprep.mubr.f32.mxu0 0.0
        %571 = vmatmul.mubr.f32.gmra.mrb[0].mxu0 %v260
        %v572 = vpop.f32.mrb[0].mxu0
        %v573 = vadd.f32 0.0, %v572
        %v574 = vpop.f32.mrb[0].mxu0
        %v575 = vadd.f32 0.0, %v574
        %576 = vmatprep.mubr.f32.mxu0 0.0
        %577 = vmatmul.mubr.f32.gmra.mrb[0].mxu0 %v261
        %v578 = vpop.f32.mrb[0].mxu0
        %v579 = vadd.f32 0.0, %v578
        %v580 = vpop.f32.mrb[0].mxu0
        %v581 = vadd.f32 0.0, %v580
        %582 = vmatprep.mubr.f32.mxu0 0.0
        %583 = vmatmul.mubr.f32.gmra.mrb[0].mxu0 %v262
        %v584 = vpop.f32.mrb[0].mxu0
        %v585 = vadd.f32 0.0, %v584
        %v586 = vpop.f32.mrb[0].mxu0
        %v587 = vadd.f32 0.0, %v586
        %588 = vmatprep.mubr.f32.mxu0 0.0
        %589 = vmatmul.mubr.f32.gmra.mrb[0].mxu0 %v263
        %v590 = vpop.f32.mrb[0].mxu0
        %v591 = vadd.f32 0.0, %v590
        %v592 = vpop.f32.mrb[0].mxu0
        %v593 = vadd.f32 0.0, %v592
        %594 = vmatprep.mubr.f32.mxu0 0.0
        %595 = vmatmul.mubr.f32.gmra.mrb[0].mxu0 %v264
        %v596 = vpop.f32.mrb[0].mxu0
        %v597 = vadd.f32 0.0, %v596
        %v598 = vpop.f32.mrb[0].mxu0
        %v599 = vadd.f32 0.0, %v598
        %600 = vmatprep.mubr.f32.mxu0 0.0
        %601 = vmatmul.mubr.f32.gmra.mrb[0].mxu0 %v265
        %v602 = vpop.f32.mrb[0].mxu0
        %v603 = vadd.f32 0.0, %v602
        %v604 = vpop.f32.mrb[0].mxu0
        %v605 = vadd.f32 0.0, %v604
        %606 = vmatprep.mubr.f32.mxu0 0.0
        %607 = vmatmul.mubr.f32.gmra.mrb[0].mxu0 %v266
        %v608 = vpop.f32.mrb[0].mxu0
        %v609 = vadd.f32 0.0, %v608
        %v610 = vpop.f32.mrb[0].mxu0
        %v611 = vadd.f32 0.0, %v610
        %612 = vmatprep.mubr.f32.mxu0 0.0
        %613 = vmatmul.mubr.f32.gmra.mrb[0].mxu0 %v267
        %v614 = vpop.f32.mrb[0].mxu0
        %v615 = vadd.f32 0.0, %v614
        %v616 = vpop.f32.mrb[0].mxu0
        %v617 = vadd.f32 0.0, %v616
        %618 = vmatprep.mubr.f32.mxu0 0.0
        %619 = vmatmul.mubr.f32.gmra.mrb[0].mxu0 %v268
        %v620 = vpop.f32.mrb[0].mxu0
        %v621 = vadd.f32 0.0, %v620
        %v622 = vpop.f32.mrb[0].mxu0
        %v623 = vadd.f32 0.0, %v622
        %624 = vmatprep.mubr.f32.mxu0 0.0
        %625 = vmatmul.mubr.f32.gmra.mrb[0].mxu0 %v269
        %v626 = vpop.f32.mrb[0].mxu0
        %v627 = vadd.f32 0.0, %v626
        %v628 = vpop.f32.mrb[0].mxu0
        %v629 = vadd.f32 0.0, %v628
        %630 = vmatprep.mubr.f32.mxu0 0.0
        %631 = vmatmul.mubr.f32.gmra.mrb[0].mxu0 %v270
        %v632 = vpop.f32.mrb[0].mxu0
        %v633 = vadd.f32 0.0, %v632
        %v634 = vpop.f32.mrb[0].mxu0
        %v635 = vadd.f32 0.0, %v634
        %636 = vmatprep.mubr.f32.mxu0 0.0
        %637 = vmatmul.mubr.f32.gmra.mrb[0].mxu0 %v271
        %v638 = vpop.f32.mrb[0].mxu0
        %v639 = vadd.f32 0.0, %v638
        %v640 = vpop.f32.mrb[0].mxu0
        %v641 = vadd.f32 0.0, %v640
        %642 = vmatprep.mubr.f32.mxu0 0.0
        %643 = vmatmul.mubr.f32.gmra.mrb[0].mxu0 %v272
        %v644 = vpop.f32.mrb[0].mxu0
        %v645 = vadd.f32 0.0, %v644
        %v646 = vpop.f32.mrb[0].mxu0
        %v647 = vadd.f32 0.0, %v646
        %648 = vmatprep.mubr.f32.mxu0 0.0
        %649 = vmatmul.mubr.f32.gmra.mrb[0].mxu0 %v273
        %v650 = vpop.f32.mrb[0].mxu0
        %v651 = vadd.f32 0.0, %v650
        %v652 = vpop.f32.mrb[0].mxu0
        %v653 = vadd.f32 0.0, %v652
        %654 = vmatprep.mubr.f32.mxu0 0.0
        %655 = vmatmul.mubr.f32.gmra.mrb[0].mxu0 %v274
        %v656 = vpop.f32.mrb[0].mxu0
        %v657 = vadd.f32 0.0, %v656
        %v658 = vpop.f32.mrb[0].mxu0
        %v659 = vadd.f32 0.0, %v658
        %660 = vdwg.mxu0
        %v661 = vld [vmem:[#allocation7] sm:$0xf]
        %v663 = vlaneseq
        %v664 = vshrl.u32 %v663, 7
        %v665 = vsub.s32 0, %v664
        %v666 = vrot.slane %v661, %v665
        %v667 = vlaneseq
        %v668 = vshrl.u32 %v667, 7
        %v669 = vsub.s32 1, %v668
        %v670 = vrot.slane %v661, %v669
        %v671 = vlaneseq
        %v672 = vshrl.u32 %v671, 7
        %v673 = vsub.s32 2, %v672
        %v674 = vrot.slane %v661, %v673
        %v675 = vlaneseq
        %v676 = vshrl.u32 %v675, 7
        %v677 = vsub.s32 3, %v676
        %v678 = vrot.slane %v661, %v677
        %v683 = vadd.f32 %v406, %v666
        %v684 = vadd.f32 %v408, %v670
        %v685 = vadd.f32 %v567, %v674
        %v686 = vadd.f32 %v569, %v678
        %v687 = vadd.f32 %v412, %v666
        %v688 = vadd.f32 %v414, %v670
        %v689 = vadd.f32 %v573, %v674
        %v690 = vadd.f32 %v575, %v678
        %v691 = vadd.f32 %v418, %v666
        %v692 = vadd.f32 %v420, %v670
        %v693 = vadd.f32 %v579, %v674
        %v694 = vadd.f32 %v581, %v678
        %v695 = vadd.f32 %v424, %v666
        %v696 = vadd.f32 %v426, %v670
        %v697 = vadd.f32 %v585, %v674
        %v698 = vadd.f32 %v587, %v678
        %v699 = vadd.f32 %v430, %v666
        %v700 = vadd.f32 %v432, %v670
        %v701 = vadd.f32 %v591, %v674
        %v702 = vadd.f32 %v593, %v678
        %v703 = vadd.f32 %v436, %v666
        %v704 = vadd.f32 %v438, %v670
        %v705 = vadd.f32 %v597, %v674
        %v706 = vadd.f32 %v599, %v678
        %v707 = vadd.f32 %v442, %v666
        %v708 = vadd.f32 %v444, %v670
        %v709 = vadd.f32 %v603, %v674
        %v710 = vadd.f32 %v605, %v678
        %v711 = vadd.f32 %v448, %v666
        %v712 = vadd.f32 %v450, %v670
        %v713 = vadd.f32 %v609, %v674
        %v714 = vadd.f32 %v611, %v678
        %v715 = vadd.f32 %v454, %v666
        %v716 = vadd.f32 %v456, %v670
        %v717 = vadd.f32 %v615, %v674
        %v718 = vadd.f32 %v617, %v678
        %v719 = vadd.f32 %v460, %v666
        %v720 = vadd.f32 %v462, %v670
        %v721 = vadd.f32 %v621, %v674
        %v722 = vadd.f32 %v623, %v678
        %v723 = vadd.f32 %v466, %v666
        %v724 = vadd.f32 %v468, %v670
        %v725 = vadd.f32 %v627, %v674
        %v726 = vadd.f32 %v629, %v678
        %v727 = vadd.f32 %v472, %v666
        %v728 = vadd.f32 %v474, %v670
        %v729 = vadd.f32 %v633, %v674
        %v730 = vadd.f32 %v635, %v678
        %v731 = vadd.f32 %v478, %v666
        %v732 = vadd.f32 %v480, %v670
        %v733 = vadd.f32 %v639, %v674
        %v734 = vadd.f32 %v641, %v678
        %v735 = vadd.f32 %v484, %v666
        %v736 = vadd.f32 %v486, %v670
        %v737 = vadd.f32 %v645, %v674
        %v738 = vadd.f32 %v647, %v678
        %v739 = vadd.f32 %v490, %v666
        %v740 = vadd.f32 %v492, %v670
        %v741 = vadd.f32 %v651, %v674
        %v742 = vadd.f32 %v653, %v678
        %v743 = vadd.f32 %v496, %v666
        %v744 = vadd.f32 %v498, %v670
        %v745 = vadd.f32 %v657, %v674
        %v746 = vadd.f32 %v659, %v678
        %v747 = vmax.f32 %v683, 0.0
        %v748 = vmax.f32 %v684, 0.0
        %v749 = vmax.f32 %v685, 0.0
        %v750 = vmax.f32 %v686, 0.0
        %v751 = vmax.f32 %v687, 0.0
        %v752 = vmax.f32 %v688, 0.0
        %v753 = vmax.f32 %v689, 0.0
        %v754 = vmax.f32 %v690, 0.0
        %v755 = vmax.f32 %v691, 0.0
        %v756 = vmax.f32 %v692, 0.0
        %v757 = vmax.f32 %v693, 0.0
        %v758 = vmax.f32 %v694, 0.0
        %v759 = vmax.f32 %v695, 0.0
        %v760 = vmax.f32 %v696, 0.0
        %v761 = vmax.f32 %v697, 0.0
        %v762 = vmax.f32 %v698, 0.0
        %v763 = vmax.f32 %v699, 0.0
        %v764 = vmax.f32 %v700, 0.0
        %v765 = vmax.f32 %v701, 0.0
        %v766 = vmax.f32 %v702, 0.0
        %v767 = vmax.f32 %v703, 0.0
        %v768 = vmax.f32 %v704, 0.0
        %v769 = vmax.f32 %v705, 0.0
        %v770 = vmax.f32 %v706, 0.0
        %v771 = vmax.f32 %v707, 0.0
        %v772 = vmax.f32 %v708, 0.0
        %v773 = vmax.f32 %v709, 0.0
        %v774 = vmax.f32 %v710, 0.0
        %v775 = vmax.f32 %v711, 0.0
        %v776 = vmax.f32 %v712, 0.0
        %v777 = vmax.f32 %v713, 0.0
        %v778 = vmax.f32 %v714, 0.0
        %v779 = vmax.f32 %v715, 0.0
        %v780 = vmax.f32 %v716, 0.0
        %v781 = vmax.f32 %v717, 0.0
        %v782 = vmax.f32 %v718, 0.0
        %v783 = vmax.f32 %v719, 0.0
        %v784 = vmax.f32 %v720, 0.0
        %v785 = vmax.f32 %v721, 0.0
        %v786 = vmax.f32 %v722, 0.0
        %v787 = vmax.f32 %v723, 0.0
        %v788 = vmax.f32 %v724, 0.0
        %v789 = vmax.f32 %v725, 0.0
        %v790 = vmax.f32 %v726, 0.0
        %v791 = vmax.f32 %v727, 0.0
        %v792 = vmax.f32 %v728, 0.0
        %v793 = vmax.f32 %v729, 0.0
        %v794 = vmax.f32 %v730, 0.0
        %v795 = vmax.f32 %v731, 0.0
        %v796 = vmax.f32 %v732, 0.0
        %v797 = vmax.f32 %v733, 0.0
        %v798 = vmax.f32 %v734, 0.0
        %v799 = vmax.f32 %v735, 0.0
        %v800 = vmax.f32 %v736, 0.0
        %v801 = vmax.f32 %v737, 0.0
        %v802 = vmax.f32 %v738, 0.0
        %v803 = vmax.f32 %v739, 0.0
        %v804 = vmax.f32 %v740, 0.0
        %v805 = vmax.f32 %v741, 0.0
        %v806 = vmax.f32 %v742, 0.0
        %v807 = vmax.f32 %v743, 0.0
        %v808 = vmax.f32 %v744, 0.0
        %v809 = vmax.f32 %v745, 0.0
        %v810 = vmax.f32 %v746, 0.0
        %v811 = vld [vmem:[#allocation8] sm:$0xf]
        %v813 = vlaneseq
        %v814 = vshrl.u32 %v813, 7
        %v815 = vsub.s32 0, %v814
        %v816 = vrot.slane %v811, %v815
        %v817 = vlaneseq
        %v818 = vshrl.u32 %v817, 7
        %v819 = vsub.s32 1, %v818
        %v820 = vrot.slane %v811, %v819
        %v821 = vlaneseq
        %v822 = vshrl.u32 %v821, 7
        %v823 = vsub.s32 2, %v822
        %v824 = vrot.slane %v811, %v823
        %v825 = vlaneseq
        %v826 = vshrl.u32 %v825, 7
        %v827 = vsub.s32 3, %v826
        %v828 = vrot.slane %v811, %v827
        %v833 = vmul.f32 %v747, %v816
        %v834 = vmul.f32 %v748, %v820
        %v835 = vmul.f32 %v749, %v824
        %v836 = vmul.f32 %v750, %v828
        %v837 = vmul.f32 %v751, %v816
        %v838 = vmul.f32 %v752, %v820
        %v839 = vmul.f32 %v753, %v824
        %v840 = vmul.f32 %v754, %v828
        %v841 = vmul.f32 %v755, %v816
        %v842 = vmul.f32 %v756, %v820
        %v843 = vmul.f32 %v757, %v824
        %v844 = vmul.f32 %v758, %v828
        %v845 = vmul.f32 %v759, %v816
        %v846 = vmul.f32 %v760, %v820
        %v847 = vmul.f32 %v761, %v824
        %v848 = vmul.f32 %v762, %v828
        %v849 = vmul.f32 %v763, %v816
        %v850 = vmul.f32 %v764, %v820
        %v851 = vmul.f32 %v765, %v824
        %v852 = vmul.f32 %v766, %v828
        %v853 = vmul.f32 %v767, %v816
        %v854 = vmul.f32 %v768, %v820
        %v855 = vmul.f32 %v769, %v824
        %v856 = vmul.f32 %v770, %v828
        %v857 = vmul.f32 %v771, %v816
        %v858 = vmul.f32 %v772, %v820
        %v859 = vmul.f32 %v773, %v824
        %v860 = vmul.f32 %v774, %v828
        %v861 = vmul.f32 %v775, %v816
        %v862 = vmul.f32 %v776, %v820
        %v863 = vmul.f32 %v777, %v824
        %v864 = vmul.f32 %v778, %v828
        %v865 = vmul.f32 %v779, %v816
        %v866 = vmul.f32 %v780, %v820
        %v867 = vmul.f32 %v781, %v824
        %v868 = vmul.f32 %v782, %v828
        %v869 = vmul.f32 %v783, %v816
        %v870 = vmul.f32 %v784, %v820
        %v871 = vmul.f32 %v785, %v824
        %v872 = vmul.f32 %v786, %v828
        %v873 = vmul.f32 %v787, %v816
        %v874 = vmul.f32 %v788, %v820
        %v875 = vmul.f32 %v789, %v824
        %v876 = vmul.f32 %v790, %v828
        %v877 = vmul.f32 %v791, %v816
        %v878 = vmul.f32 %v792, %v820
        %v879 = vmul.f32 %v793, %v824
        %v880 = vmul.f32 %v794, %v828
        %v881 = vmul.f32 %v795, %v816
        %v882 = vmul.f32 %v796, %v820
        %v883 = vmul.f32 %v797, %v824
        %v884 = vmul.f32 %v798, %v828
        %v885 = vmul.f32 %v799, %v816
        %v886 = vmul.f32 %v800, %v820
        %v887 = vmul.f32 %v801, %v824
        %v888 = vmul.f32 %v802, %v828
        %v889 = vmul.f32 %v803, %v816
        %v890 = vmul.f32 %v804, %v820
        %v891 = vmul.f32 %v805, %v824
        %v892 = vmul.f32 %v806, %v828
        %v893 = vmul.f32 %v807, %v816
        %v894 = vmul.f32 %v808, %v820
        %v895 = vmul.f32 %v809, %v824
        %v896 = vmul.f32 %v810, %v828
        %v897 = vadd.f32 %v833, %v834
        %v898 = vadd.f32 %v897, %v835
        %v899 = vadd.f32 %v898, %v836
        %900 = vadd.xlane.f32.xlu0 %v899
        %v901 = vpop.xlane.xlu0 %900
        %v902 = vadd.f32 %v837, %v838
        %v903 = vadd.f32 %v902, %v839
        %v904 = vadd.f32 %v903, %v840
        %905 = vadd.xlane.f32.xlu0 %v904
        %v906 = vpop.xlane.xlu0 %905
        %v907 = vadd.f32 %v841, %v842
        %v908 = vadd.f32 %v907, %v843
        %v909 = vadd.f32 %v908, %v844
        %910 = vadd.xlane.f32.xlu0 %v909
        %v911 = vpop.xlane.xlu0 %910
        %v912 = vadd.f32 %v845, %v846
        %v913 = vadd.f32 %v912, %v847
        %v914 = vadd.f32 %v913, %v848
        %915 = vadd.xlane.f32.xlu0 %v914
        %v916 = vpop.xlane.xlu0 %915
        %v917 = vadd.f32 %v849, %v850
        %v918 = vadd.f32 %v917, %v851
        %v919 = vadd.f32 %v918, %v852
        %920 = vadd.xlane.f32.xlu0 %v919
        %v921 = vpop.xlane.xlu0 %920
        %v922 = vadd.f32 %v853, %v854
        %v923 = vadd.f32 %v922, %v855
        %v924 = vadd.f32 %v923, %v856
        %925 = vadd.xlane.f32.xlu0 %v924
        %v926 = vpop.xlane.xlu0 %925
        %v927 = vadd.f32 %v857, %v858
        %v928 = vadd.f32 %v927, %v859
        %v929 = vadd.f32 %v928, %v860
        %930 = vadd.xlane.f32.xlu0 %v929
        %v931 = vpop.xlane.xlu0 %930
        %v932 = vadd.f32 %v861, %v862
        %v933 = vadd.f32 %v932, %v863
        %v934 = vadd.f32 %v933, %v864
        %935 = vadd.xlane.f32.xlu0 %v934
        %v936 = vpop.xlane.xlu0 %935
        %v937 = vadd.f32 %v865, %v866
        %v938 = vadd.f32 %v937, %v867
        %v939 = vadd.f32 %v938, %v868
        %940 = vadd.xlane.f32.xlu0 %v939
        %v941 = vpop.xlane.xlu0 %940
        %v942 = vadd.f32 %v869, %v870
        %v943 = vadd.f32 %v942, %v871
        %v944 = vadd.f32 %v943, %v872
        %945 = vadd.xlane.f32.xlu0 %v944
        %v946 = vpop.xlane.xlu0 %945
        %v947 = vadd.f32 %v873, %v874
        %v948 = vadd.f32 %v947, %v875
        %v949 = vadd.f32 %v948, %v876
        %950 = vadd.xlane.f32.xlu0 %v949
        %v951 = vpop.xlane.xlu0 %950
        %v952 = vadd.f32 %v877, %v878
        %v953 = vadd.f32 %v952, %v879
        %v954 = vadd.f32 %v953, %v880
        %955 = vadd.xlane.f32.xlu0 %v954
        %v956 = vpop.xlane.xlu0 %955
        %v957 = vadd.f32 %v881, %v882
        %v958 = vadd.f32 %v957, %v883
        %v959 = vadd.f32 %v958, %v884
        %960 = vadd.xlane.f32.xlu0 %v959
        %v961 = vpop.xlane.xlu0 %960
        %v962 = vadd.f32 %v885, %v886
        %v963 = vadd.f32 %v962, %v887
        %v964 = vadd.f32 %v963, %v888
        %965 = vadd.xlane.f32.xlu0 %v964
        %v966 = vpop.xlane.xlu0 %965
        %v967 = vadd.f32 %v889, %v890
        %v968 = vadd.f32 %v967, %v891
        %v969 = vadd.f32 %v968, %v892
        %970 = vadd.xlane.f32.xlu0 %v969
        %v971 = vpop.xlane.xlu0 %970
        %v972 = vadd.f32 %v893, %v894
        %v973 = vadd.f32 %v972, %v895
        %v974 = vadd.f32 %v973, %v896
        %975 = vadd.xlane.f32.xlu0 %v974
        %v976 = vpop.xlane.xlu0 %975
        %v993 = vlaneseq
        %v994 = vand.u32 %v993, 127
        %v995 = vlaneseq
        %v996 = vshrl.u32 %v995, 7
        %v997 = vsub.s32 %v994, %v996
        %v998 = vrot.slane %v901, %v997
        %v999 = vadd.s32 %v994, 4294967288
        %v1000 = vlaneseq
        %v1001 = vshrl.u32 %v1000, 7
        %v1002 = vsub.s32 %v999, %v1001
        %v1003 = vrot.slane %v906, %v1002
        %vm1004 = vcmask 130112
        %v1005 = vsel %vm1004, %v1003, %v998
        %v1006 = vadd.s32 %v994, 4294967280
        %v1007 = vlaneseq
        %v1008 = vshrl.u32 %v1007, 7
        %v1009 = vsub.s32 %v1006, %v1008
        %v1010 = vrot.slane %v911, %v1009
        %vm1011 = vcmask 195712
        %v1012 = vsel %vm1011, %v1010, %v1005
        %v1013 = vadd.s32 %v994, 4294967272
        %v1014 = vlaneseq
        %v1015 = vshrl.u32 %v1014, 7
        %v1016 = vsub.s32 %v1013, %v1015
        %v1017 = vrot.slane %v916, %v1016
        %vm1018 = vcmask 261312
        %v1019 = vsel %vm1018, %v1017, %v1012
        %v1020 = vadd.s32 %v994, 4294967264
        %v1021 = vlaneseq
        %v1022 = vshrl.u32 %v1021, 7
        %v1023 = vsub.s32 %v1020, %v1022
        %v1024 = vrot.slane %v921, %v1023
        %vm1025 = vcmask 326912
        %v1026 = vsel %vm1025, %v1024, %v1019
        %v1027 = vadd.s32 %v994, 4294967256
        %v1028 = vlaneseq
        %v1029 = vshrl.u32 %v1028, 7
        %v1030 = vsub.s32 %v1027, %v1029
        %v1031 = vrot.slane %v926, %v1030
        %vm1032 = vcmask 392512
        %v1033 = vsel %vm1032, %v1031, %v1026
        %v1034 = vadd.s32 %v994, 4294967248
        %v1035 = vlaneseq
        %v1036 = vshrl.u32 %v1035, 7
        %v1037 = vsub.s32 %v1034, %v1036
        %v1038 = vrot.slane %v931, %v1037
        %vm1039 = vcmask 458112
        %v1040 = vsel %vm1039, %v1038, %v1033
        %v1041 = vadd.s32 %v994, 4294967240
        %v1042 = vlaneseq
        %v1043 = vshrl.u32 %v1042, 7
        %v1044 = vsub.s32 %v1041, %v1043
        %v1045 = vrot.slane %v936, %v1044
        %vm1046 = vcmask 523712
        %v1047 = vsel %vm1046, %v1045, %v1040
        %v1048 = vlaneseq
        %v1049 = vshrl.u32 %v1048, 7
        %v1050 = vsub.s32 %v994, %v1049
        %v1051 = vrot.slane %v941, %v1050
        %v1052 = vlaneseq
        %v1053 = vshrl.u32 %v1052, 7
        %v1054 = vsub.s32 %v999, %v1053
        %v1055 = vrot.slane %v946, %v1054
        %v1056 = vsel %vm1004, %v1055, %v1051
        %v1057 = vlaneseq
        %v1058 = vshrl.u32 %v1057, 7
        %v1059 = vsub.s32 %v1006, %v1058
        %v1060 = vrot.slane %v951, %v1059
        %v1061 = vsel %vm1011, %v1060, %v1056
        %v1062 = vlaneseq
        %v1063 = vshrl.u32 %v1062, 7
        %v1064 = vsub.s32 %v1013, %v1063
        %v1065 = vrot.slane %v956, %v1064
        %v1066 = vsel %vm1018, %v1065, %v1061
        %v1067 = vlaneseq
        %v1068 = vshrl.u32 %v1067, 7
        %v1069 = vsub.s32 %v1020, %v1068
        %v1070 = vrot.slane %v961, %v1069
        %v1071 = vsel %vm1025, %v1070, %v1066
        %v1072 = vlaneseq
        %v1073 = vshrl.u32 %v1072, 7
        %v1074 = vsub.s32 %v1027, %v1073
        %v1075 = vrot.slane %v966, %v1074
        %v1076 = vsel %vm1032, %v1075, %v1071
        %v1077 = vlaneseq
        %v1078 = vshrl.u32 %v1077, 7
        %v1079 = vsub.s32 %v1034, %v1078
        %v1080 = vrot.slane %v971, %v1079
        %v1081 = vsel %vm1039, %v1080, %v1076
        %v1082 = vlaneseq
        %v1083 = vshrl.u32 %v1082, 7
        %v1084 = vsub.s32 %v1041, %v1083
        %v1085 = vrot.slane %v976, %v1084
        %v1086 = vsel %vm1046, %v1085, %v1081
        %vm1087 = vcmask 1041409
        %v1088 = vsel %vm1087, %v1086, %v1047
        %vm1090 = vcmask 517120
        %v1091 = vsel %vm1090, %v1088, -inf
        %1092 = vmax.xlane.f32.xlu0 %v1091
        %v1093 = vpop.xlane.xlu0 %1092
        %v1095 = vlaneseq
        %v1096 = vshrl.u32 %v1095, 7
        %v1097 = vsub.s32 0, %v1096
        %v1098 = vrot.slane %v1093, %v1097
        %v1099 = vlaneseq
        %v1100 = vshrl.u32 %v1099, 7
        %v1101 = vsub.s32 1, %v1100
        %v1102 = vrot.slane %v1093, %v1101
        %v1105 = vsub.f32 %v901, %v1098
        %v1106 = vsub.f32 %v906, %v1098
        %v1107 = vsub.f32 %v911, %v1098
        %v1108 = vsub.f32 %v916, %v1098
        %v1109 = vsub.f32 %v921, %v1098
        %v1110 = vsub.f32 %v926, %v1098
        %v1111 = vsub.f32 %v931, %v1098
        %v1112 = vsub.f32 %v936, %v1098
        %v1113 = vsub.f32 %v941, %v1102
        %v1114 = vsub.f32 %v946, %v1102
        %v1115 = vsub.f32 %v951, %v1102
        %v1116 = vsub.f32 %v956, %v1102
        %v1117 = vsub.f32 %v961, %v1102
        %v1118 = vsub.f32 %v966, %v1102
        %v1119 = vsub.f32 %v971, %v1102
        %v1120 = vsub.f32 %v976, %v1102
        %v1121 = vmul.f32 %v1105, 1.442695
        %v1122 = vpow.pop %v1121
        %v1123 = vmul.f32 %v1106, 1.442695
        %v1124 = vpow.pop %v1123
        %v1125 = vmul.f32 %v1107, 1.442695
        %v1126 = vpow.pop %v1125
        %v1127 = vmul.f32 %v1108, 1.442695
        %v1128 = vpow.pop %v1127
        %v1129 = vmul.f32 %v1109, 1.442695
        %v1130 = vpow.pop %v1129
        %v1131 = vmul.f32 %v1110, 1.442695
        %v1132 = vpow.pop %v1131
        %v1133 = vmul.f32 %v1111, 1.442695
        %v1134 = vpow.pop %v1133
        %v1135 = vmul.f32 %v1112, 1.442695
        %v1136 = vpow.pop %v1135
        %v1137 = vmul.f32 %v1113, 1.442695
        %v1138 = vpow.pop %v1137
        %v1139 = vmul.f32 %v1114, 1.442695
        %v1140 = vpow.pop %v1139
        %v1141 = vmul.f32 %v1115, 1.442695
        %v1142 = vpow.pop %v1141
        %v1143 = vmul.f32 %v1116, 1.442695
        %v1144 = vpow.pop %v1143
        %v1145 = vmul.f32 %v1117, 1.442695
        %v1146 = vpow.pop %v1145
        %v1147 = vmul.f32 %v1118, 1.442695
        %v1148 = vpow.pop %v1147
        %v1149 = vmul.f32 %v1119, 1.442695
        %v1150 = vpow.pop %v1149
        %v1151 = vmul.f32 %v1120, 1.442695
        %v1152 = vpow.pop %v1151
        %1169 = vset.pattern.permute.xlu0 0
        %1170 = vperm.xlu0 %1169, %v1122
        %v1171 = vpop.permute.xlu0 %1170
        %1172 = vset.pattern.permute.xlu0 0
        %1173 = vperm.xlu0 %1172, %v1124
        %v1174 = vpop.permute.xlu0 %1173
        %1175 = vset.pattern.permute.xlu0 0
        %1176 = vperm.xlu0 %1175, %v1126
        %v1177 = vpop.permute.xlu0 %1176
        %1178 = vset.pattern.permute.xlu0 0
        %1179 = vperm.xlu0 %1178, %v1128
        %v1180 = vpop.permute.xlu0 %1179
        %1181 = vset.pattern.permute.xlu0 0
        %1182 = vperm.xlu0 %1181, %v1130
        %v1183 = vpop.permute.xlu0 %1182
        %1184 = vset.pattern.permute.xlu0 0
        %1185 = vperm.xlu0 %1184, %v1132
        %v1186 = vpop.permute.xlu0 %1185
        %1187 = vset.pattern.permute.xlu0 0
        %1188 = vperm.xlu0 %1187, %v1134
        %v1189 = vpop.permute.xlu0 %1188
        %1190 = vset.pattern.permute.xlu0 0
        %1191 = vperm.xlu0 %1190, %v1136
        %v1192 = vpop.permute.xlu0 %1191
        %1193 = vset.pattern.permute.xlu0 0
        %1194 = vperm.xlu0 %1193, %v1138
        %v1195 = vpop.permute.xlu0 %1194
        %1196 = vset.pattern.permute.xlu0 0
        %1197 = vperm.xlu0 %1196, %v1140
        %v1198 = vpop.permute.xlu0 %1197
        %1199 = vset.pattern.permute.xlu0 0
        %1200 = vperm.xlu0 %1199, %v1142
        %v1201 = vpop.permute.xlu0 %1200
        %1202 = vset.pattern.permute.xlu0 0
        %1203 = vperm.xlu0 %1202, %v1144
        %v1204 = vpop.permute.xlu0 %1203
        %1205 = vset.pattern.permute.xlu0 0
        %1206 = vperm.xlu0 %1205, %v1146
        %v1207 = vpop.permute.xlu0 %1206
        %1208 = vset.pattern.permute.xlu0 0
        %1209 = vperm.xlu0 %1208, %v1148
        %v1210 = vpop.permute.xlu0 %1209
        %1211 = vset.pattern.permute.xlu0 0
        %1212 = vperm.xlu0 %1211, %v1150
        %v1213 = vpop.permute.xlu0 %1212
        %1214 = vset.pattern.permute.xlu0 0
        %1215 = vperm.xlu0 %1214, %v1152
        %v1216 = vpop.permute.xlu0 %1215
        %v1217 = vlaneseq
        %v1218 = vshrl.u32 %v1217, 7
        %v1219 = vsub.s32 %v994, %v1218
        %v1220 = vrot.slane %v1171, %v1219
        %v1221 = vlaneseq
        %v1222 = vshrl.u32 %v1221, 7
        %v1223 = vsub.s32 %v999, %v1222
        %v1224 = vrot.slane %v1174, %v1223
        %v1225 = vsel %vm1004, %v1224, %v1220
        %v1226 = vlaneseq
        %v1227 = vshrl.u32 %v1226, 7
        %v1228 = vsub.s32 %v1006, %v1227
        %v1229 = vrot.slane %v1177, %v1228
        %v1230 = vsel %vm1011, %v1229, %v1225
        %v1231 = vlaneseq
        %v1232 = vshrl.u32 %v1231, 7
        %v1233 = vsub.s32 %v1013, %v1232
        %v1234 = vrot.slane %v1180, %v1233
        %v1235 = vsel %vm1018, %v1234, %v1230
        %v1236 = vlaneseq
        %v1237 = vshrl.u32 %v1236, 7
        %v1238 = vsub.s32 %v1020, %v1237
        %v1239 = vrot.slane %v1183, %v1238
        %v1240 = vsel %vm1025, %v1239, %v1235
        %v1241 = vlaneseq
        %v1242 = vshrl.u32 %v1241, 7
        %v1243 = vsub.s32 %v1027, %v1242
        %v1244 = vrot.slane %v1186, %v1243
        %v1245 = vsel %vm1032, %v1244, %v1240
        %v1246 = vlaneseq
        %v1247 = vshrl.u32 %v1246, 7
        %v1248 = vsub.s32 %v1034, %v1247
        %v1249 = vrot.slane %v1189, %v1248
        %v1250 = vsel %vm1039, %v1249, %v1245
        %v1251 = vlaneseq
        %v1252 = vshrl.u32 %v1251, 7
        %v1253 = vsub.s32 %v1041, %v1252
        %v1254 = vrot.slane %v1192, %v1253
        %v1255 = vsel %vm1046, %v1254, %v1250
        %v1256 = vlaneseq
        %v1257 = vshrl.u32 %v1256, 7
        %v1258 = vsub.s32 %v994, %v1257
        %v1259 = vrot.slane %v1195, %v1258
        %v1260 = vlaneseq
        %v1261 = vshrl.u32 %v1260, 7
        %v1262 = vsub.s32 %v999, %v1261
        %v1263 = vrot.slane %v1198, %v1262
        %v1264 = vsel %vm1004, %v1263, %v1259
        %v1265 = vlaneseq
        %v1266 = vshrl.u32 %v1265, 7
        %v1267 = vsub.s32 %v1006, %v1266
        %v1268 = vrot.slane %v1201, %v1267
        %v1269 = vsel %vm1011, %v1268, %v1264
        %v1270 = vlaneseq
        %v1271 = vshrl.u32 %v1270, 7
        %v1272 = vsub.s32 %v1013, %v1271
        %v1273 = vrot.slane %v1204, %v1272
        %v1274 = vsel %vm1018, %v1273, %v1269
        %v1275 = vlaneseq
        %v1276 = vshrl.u32 %v1275, 7
        %v1277 = vsub.s32 %v1020, %v1276
        %v1278 = vrot.slane %v1207, %v1277
        %v1279 = vsel %vm1025, %v1278, %v1274
        %v1280 = vlaneseq
        %v1281 = vshrl.u32 %v1280, 7
        %v1282 = vsub.s32 %v1027, %v1281
        %v1283 = vrot.slane %v1210, %v1282
        %v1284 = vsel %vm1032, %v1283, %v1279
        %v1285 = vlaneseq
        %v1286 = vshrl.u32 %v1285, 7
        %v1287 = vsub.s32 %v1034, %v1286
        %v1288 = vrot.slane %v1213, %v1287
        %v1289 = vsel %vm1039, %v1288, %v1284
        %v1290 = vlaneseq
        %v1291 = vshrl.u32 %v1290, 7
        %v1292 = vsub.s32 %v1041, %v1291
        %v1293 = vrot.slane %v1216, %v1292
        %v1294 = vsel %vm1046, %v1293, %v1289
        %v1295 = vsel %vm1087, %v1294, %v1255
        %v1297 = vsel %vm1090, %v1295, 0.0
        %1298 = vadd.xlane.f32.xlu0 %v1297
        %v1299 = vpop.xlane.xlu0 %1298
        %v1300 = vrcp.pop %v1299
        %v1302 = vlaneseq
        %v1303 = vshrl.u32 %v1302, 7
        %v1304 = vsub.s32 0, %v1303
        %v1305 = vrot.slane %v1300, %v1304
        %v1306 = vlaneseq
        %v1307 = vshrl.u32 %v1306, 7
        %v1308 = vsub.s32 1, %v1307
        %v1309 = vrot.slane %v1300, %v1308
        %v1312 = vmul.f32 %v1122, %v1305
        %v1313 = vmul.f32 %v1124, %v1305
        %v1314 = vmul.f32 %v1126, %v1305
        %v1315 = vmul.f32 %v1128, %v1305
        %v1316 = vmul.f32 %v1130, %v1305
        %v1317 = vmul.f32 %v1132, %v1305
        %v1318 = vmul.f32 %v1134, %v1305
        %v1319 = vmul.f32 %v1136, %v1305
        %v1320 = vmul.f32 %v1138, %v1309
        %v1321 = vmul.f32 %v1140, %v1309
        %v1322 = vmul.f32 %v1142, %v1309
        %v1323 = vmul.f32 %v1144, %v1309
        %v1324 = vmul.f32 %v1146, %v1309
        %v1325 = vmul.f32 %v1148, %v1309
        %v1326 = vmul.f32 %v1150, %v1309
        %v1327 = vmul.f32 %v1152, %v1309
        %1329 = vset.pattern.permute.xlu0 0
        %1330 = vperm.xlu0 %1329, %v1312
        %v1331 = vpop.permute.xlu0 %1330
        %1334 = vset.pattern.permute.xlu0 0
        %1335 = vperm.xlu0 %1334, %v1313
        %v1336 = vpop.permute.xlu0 %1335
        %1339 = vset.pattern.permute.xlu0 0
        %1340 = vperm.xlu0 %1339, %v1314
        %v1341 = vpop.permute.xlu0 %1340
        %1344 = vset.pattern.permute.xlu0 0
        %1345 = vperm.xlu0 %1344, %v1315
        %v1346 = vpop.permute.xlu0 %1345
        %1349 = vset.pattern.permute.xlu0 0
        %1350 = vperm.xlu0 %1349, %v1316
        %v1351 = vpop.permute.xlu0 %1350
        %1354 = vset.pattern.permute.xlu0 0
        %1355 = vperm.xlu0 %1354, %v1317
        %v1356 = vpop.permute.xlu0 %1355
        %1359 = vset.pattern.permute.xlu0 0
        %1360 = vperm.xlu0 %1359, %v1318
        %v1361 = vpop.permute.xlu0 %1360
        %1364 = vset.pattern.permute.xlu0 0
        %1365 = vperm.xlu0 %1364, %v1319
        %v1366 = vpop.permute.xlu0 %1365
        %1369 = vset.pattern.permute.xlu0 0
        %1370 = vperm.xlu0 %1369, %v1320
        %v1371 = vpop.permute.xlu0 %1370
        %1374 = vset.pattern.permute.xlu0 0
        %1375 = vperm.xlu0 %1374, %v1321
        %v1376 = vpop.permute.xlu0 %1375
        %1379 = vset.pattern.permute.xlu0 0
        %1380 = vperm.xlu0 %1379, %v1322
        %v1381 = vpop.permute.xlu0 %1380
        %1384 = vset.pattern.permute.xlu0 0
        %1385 = vperm.xlu0 %1384, %v1323
        %v1386 = vpop.permute.xlu0 %1385
        %1389 = vset.pattern.permute.xlu0 0
        %1390 = vperm.xlu0 %1389, %v1324
        %v1391 = vpop.permute.xlu0 %1390
        %1394 = vset.pattern.permute.xlu0 0
        %1395 = vperm.xlu0 %1394, %v1325
        %v1396 = vpop.permute.xlu0 %1395
        %1399 = vset.pattern.permute.xlu0 0
        %1400 = vperm.xlu0 %1399, %v1326
        %v1401 = vpop.permute.xlu0 %1400
        %1404 = vset.pattern.permute.xlu0 0
        %1405 = vperm.xlu0 %1404, %v1327
        %v1406 = vpop.permute.xlu0 %1405
        %v1408 = vmul.f32 %v259, %v1331
        %v1409 = vmul.f32 %v260, %v1336
        %v1410 = vmul.f32 %v261, %v1341
        %v1411 = vmul.f32 %v262, %v1346
        %v1412 = vmul.f32 %v263, %v1351
        %v1413 = vmul.f32 %v264, %v1356
        %v1414 = vmul.f32 %v265, %v1361
        %v1415 = vmul.f32 %v266, %v1366
        %v1416 = vmul.f32 %v267, %v1371
        %v1417 = vmul.f32 %v268, %v1376
        %v1418 = vmul.f32 %v269, %v1381
        %v1419 = vmul.f32 %v270, %v1386
        %v1420 = vmul.f32 %v271, %v1391
        %v1421 = vmul.f32 %v272, %v1396
        %v1422 = vmul.f32 %v273, %v1401
        %v1423 = vmul.f32 %v274, %v1406
        %1424 = vst [vmem:[%s256] sm:$0xff] %v1408
        %1425 = vst [vmem:[%s256 + $0x8] sm:$0xff] %v1409
        %1426 = vst [vmem:[%s256 + $0x10] sm:$0xff] %v1410
        %1427 = vst [vmem:[%s256 + $0x18] sm:$0xff] %v1411
        %1428 = vst [vmem:[%s256 + $0x20] sm:$0xff] %v1412
        %1429 = vst [vmem:[%s256 + $0x28] sm:$0xff] %v1413
        %1430 = vst [vmem:[%s256 + $0x30] sm:$0xff] %v1414
        %1431 = vst [vmem:[%s256 + $0x38] sm:$0xff] %v1415
        %1432 = vst [vmem:[%s256 + $0x40] sm:$0xff] %v1416
        %1433 = vst [vmem:[%s256 + $0x48] sm:$0xff] %v1417
        %1434 = vst [vmem:[%s256 + $0x50] sm:$0xff] %v1418
        %1435 = vst [vmem:[%s256 + $0x58] sm:$0xff] %v1419
        %1436 = vst [vmem:[%s256 + $0x60] sm:$0xff] %v1420
        %1437 = vst [vmem:[%s256 + $0x68] sm:$0xff] %v1421
        %1438 = vst [vmem:[%s256 + $0x70] sm:$0xff] %v1422
        %1439 = vst [vmem:[%s256 + $0x78] sm:$0xff] %v1423
        %s1440 = sand.u32 %s120, 1
        %s1441 = scalar_lea.sflag [#allocation4], %s1440
        %s1442 = sand.u32 %s120, 1
        %s1443 = smul.addr %s1442, 128
        %s1444 = scalar_lea.vmem [#allocation10], %s1443
        // Predicated region
        $region53: #{tpu_custom_call.1} parent=35 // pred_check
          %p1445 = pneg %p130
        $region54: #{tpu_custom_call.1} parent=35 // pred_check_branch
          %1447 = sbr.rel (%p1445) target = $region56
        $region55: #{tpu_custom_call.1} parent=35 // pred_region
          %s1448 = smul.u32 2, %s23
          %s1450 = ssub.s32 2048, 2048
          %1451 = vsyncadd %s1441, %s1450
          %s1452 = smul.addr %s1448, 8
          %s1453 = smul.addr %s1452, 128
          %s1454 = scalar_lea.hbm %s4, %s1453
          %s1455 = sshll.u32 %s1444, 4
          %s1456 = int_to_ptr.vmem [resolvable:$true] %s1455
          %1461 = dma.vmem_to_hbm [thread:$0]  %s1456, 2048, %s1454, %s1441, 128, 128, 8
        $region56: #{tpu_custom_call.1} parent=35 // pred_fallthru
          _
      $region36: #{tpu_custom_call.1} parent=5 // pred_fallthru
        _
      %p1462 = scmp.le.s32.totalorder 2, %s18
      // Predicated region
      $region57: #{tpu_custom_call.1} parent=5 // pred_check
        %p1463 = pneg %p1462
      $region58: #{tpu_custom_call.1} parent=5 // pred_check_branch
        %1465 = sbr.rel (%p1463) target = $region60
      $region59: #{tpu_custom_call.1} parent=5 // pred_region
        %s1466 = ssub.s32 %s18, 2
        // Predicated region
        $region61: #{tpu_custom_call.1} parent=59 // pred_check
          %p1467 = pneg %p136
        $region62: #{tpu_custom_call.1} parent=59 // pred_check_branch
          %1469 = sbr.rel (%p1467) target = $region64
        $region63: #{tpu_custom_call.1} parent=59 // pred_region
          %s1470 = sand.u32 %s121, 1
          %s1471 = scalar_lea.sflag [#allocation4], %s1470
          %s1472 = sand.u32 %s121, 1
          %s1473 = smul.addr %s1472, 128
          %s1474 = scalar_lea.vmem [#allocation10], %s1473
          %1475 = dma.done %s1471, 2048
        $region64: #{tpu_custom_call.1} parent=59 // pred_fallthru
          _
      $region60: #{tpu_custom_call.1} parent=5 // pred_fallthru
        _
    $region6: #{tpu_custom_call.1} parent=1 // loop_footer
      %s22 = sadd.s32 1, %s18
    $region7: #{tpu_custom_call.1} parent=1 // loop_footer_branch
      %17 = sbr.rel target = $region3
    $region8: #{tpu_custom_call.1} parent=1 // loop_exit
      _
    %1476 = vsyncpa [#allocation3], 1
    %s1477 = scalar_lea.sflag [#allocation3], 1
    %1478 = vsyncpa %s1477, 1
    %1479 = vsyncpa [#allocation6], 1
    %1480 = vsyncpa [#allocation9], 1
    %1481 = vsyncpa [#allocation4], 1
    %s1482 = scalar_lea.sflag [#allocation4], 1
    %1483 = vsyncpa %s1482, 1

</llo_original>
